<compile_context>
chip_gen: v7x
topology: tpu7x:2x2x1
jax: 0.10.0
libtpu: 0.0.40
codegen_flags: <defaults>
</compile_context>

<pallas_src>
import functools
import math

import jax
import jax.numpy as jnp
from jax import lax
from jax.experimental import pallas as pl
from jax.experimental.pallas import tpu as pltpu

NEG_SLOPE = 0.2   # nn.LeakyReLU(0.2)
BN_EPS = 1e-5     # nn.BatchNorm1d default eps


def _leaky(x):
    return jnp.where(x >= 0, x, NEG_SLOPE * x)


# ----------------------------------------------------------------------------
# Kernel A: SAM + classification-sm + static GCN (+ residual) + gap()
# ----------------------------------------------------------------------------
def sam_static_kernel(x_ref, wcat_ref, btr_ref, adjn_ref, ws_ref,
                      out1_ref, vT_ref, h_ref, xglb_ref, *, num_nodes):
    x = x_ref[0]                                                    # (Cf, HW)
    # One MXU pass of x for both fc (scores) and conv_transform (xt).
    s_all = jnp.dot(wcat_ref[...], x,
                    preferred_element_type=jnp.float32)             # (N+D, HW)
    scores = s_all[:num_nodes, :]                                   # (N, HW)
    # topk(1, -1)[0].mean(-1) == max over spatial
    out1_ref[0] = jnp.max(scores, axis=1, keepdims=True)            # (N, 1)
    mask = jax.nn.sigmoid(scores)                                   # (N, HW)
    xt = s_all[num_nodes:, :] + btr_ref[...]                        # (D, HW)
    # v^T = mask @ xt^T  (contract spatial dim); kept node-major (N, D)
    vT = lax.dot_general(mask, xt, (((1,), (1,)), ((), ())),
                         preferred_element_type=jnp.float32)        # (N, D)
    vT_ref[0] = vT
    # static GCN: leaky(adj_norm @ v^T) @ W_static, then residual add
    t = _leaky(jnp.dot(adjn_ref[...], vT, preferred_element_type=jnp.float32))
    h = vT + jnp.dot(t, ws_ref[...], preferred_element_type=jnp.float32)
    h_ref[0] = h                                                    # (N, D)
    # gap(): AdaptiveAvgPool1d(1) over the node dimension
    xglb_ref[0] = jnp.mean(h, axis=0, keepdims=True)                # (1, D)


def run_sam_static(x_feat, w_cat, b_tr, adj_norm, w_static, num_nodes):
    B, Cf, HW = x_feat.shape
    ND = w_cat.shape[0]
    N = num_nodes
    D = ND - N
    kernel = functools.partial(sam_static_kernel, num_nodes=N)
    out1, vT, h, xglb = pl.pallas_call(
        kernel,
        grid=(B,),
        in_specs=[
            pl.BlockSpec((1, Cf, HW), lambda b: (b, 0, 0)),
            pl.BlockSpec((ND, Cf), lambda b: (0, 0)),
            pl.BlockSpec((D, 1), lambda b: (0, 0)),
            pl.BlockSpec((N, N), lambda b: (0, 0)),
            pl.BlockSpec((D, D), lambda b: (0, 0)),
        ],
        out_specs=[
            pl.BlockSpec((1, N, 1), lambda b: (b, 0, 0)),
            pl.BlockSpec((1, N, D), lambda b: (b, 0, 0)),
            pl.BlockSpec((1, N, D), lambda b: (b, 0, 0)),
            pl.BlockSpec((1, 1, D), lambda b: (b, 0, 0)),
        ],
        out_shape=[
            jax.ShapeDtypeStruct((B, N, 1), jnp.float32),
            jax.ShapeDtypeStruct((B, N, D), jnp.float32),
            jax.ShapeDtypeStruct((B, N, D), jnp.float32),
            jax.ShapeDtypeStruct((B, 1, D), jnp.float32),
        ],
        compiler_params=pltpu.CompilerParams(dimension_semantics=("parallel",)),
    )(x_feat, w_cat, b_tr, adj_norm, w_static)
    return out1[:, :, 0], vT, h, xglb[:, 0, :]


# ----------------------------------------------------------------------------
# Kernel B: dynamic graph construction + gen_adjs + dynamic GCN + head diag
# ----------------------------------------------------------------------------
def dyn_head_kernel(h_ref, vT_ref, g_ref, wcog_ref, wcox_ref, bco_ref,
                    sadj_ref, wdyn_ref, wlast_ref, blast_ref, out2_ref):
    h = h_ref[0]                                                    # (N, D)
    g = g_ref[0]                                                    # (1, D)
    # conv_create_co_mat split: first D input channels hit the (expanded)
    # global vector, last D hit h^T -> matvec + small matmul, no concat.
    term_g = lax.dot_general(wcog_ref[...], g, (((1,), (1,)), ((), ())),
                             preferred_element_type=jnp.float32)    # (N, 1)
    term_x = lax.dot_general(wcox_ref[...], h, (((1,), (1,)), ((), ())),
                             preferred_element_type=jnp.float32)    # (N, N)
    A = jax.nn.sigmoid(term_x + term_g + bco_ref[...])
    A = (A + sadj_ref[...]) * 0.5                                   # (adj+static)/2
    # gen_adjs: adj = diag(d) @ A^T @ diag(d),  d = rowsum(A)^-0.5
    d = lax.rsqrt(jnp.sum(A, axis=1, keepdims=True))                # (N, 1)
    m = d * h                                                       # diag(d) @ h
    t = lax.dot_general(A, m, (((0,), (0,)), ((), ())),
                        preferred_element_type=jnp.float32)         # A^T @ m
    t = _leaky(d * t)
    z = _leaky(jnp.dot(t, wdyn_ref[...],
                       preferred_element_type=jnp.float32))         # (N, Dout)
    # head: out2 = diag(w_last @ (v + z^T)) + b_last, computed directly
    y = vT_ref[0] + z                                               # (N, D)
    out2_ref[0] = (jnp.sum(wlast_ref[...] * y, axis=1, keepdims=True)
                   + blast_ref[...])                                # (N, 1)


def run_dyn_head(h, vT, g3, w_co_g, w_co_x, b_co, static_adj, w_dyn,
                 w_last, b_last):
    B, N, D = h.shape
    Dout = w_dyn.shape[1]
    out2 = pl.pallas_call(
        dyn_head_kernel,
        grid=(B,),
        in_specs=[
            pl.BlockSpec((1, N, D), lambda b: (b, 0, 0)),
            pl.BlockSpec((1, N, D), lambda b: (b, 0, 0)),
            pl.BlockSpec((1, 1, D), lambda b: (b, 0, 0)),
            pl.BlockSpec((N, D), lambda b: (0, 0)),
            pl.BlockSpec((N, D), lambda b: (0, 0)),
            pl.BlockSpec((N, 1), lambda b: (0, 0)),
            pl.BlockSpec((N, N), lambda b: (0, 0)),
            pl.BlockSpec((D, Dout), lambda b: (0, 0)),
            pl.BlockSpec((N, Dout), lambda b: (0, 0)),
            pl.BlockSpec((N, 1), lambda b: (0, 0)),
        ],
        out_specs=pl.BlockSpec((1, N, 1), lambda b: (b, 0, 0)),
        out_shape=jax.ShapeDtypeStruct((B, N, 1), jnp.float32),
        compiler_params=pltpu.CompilerParams(dimension_semantics=("parallel",)),
    )(h, vT, g3, w_co_g, w_co_x, b_co, static_adj, w_dyn, w_last, b_last)
    return out2[:, :, 0]


# ----------------------------------------------------------------------------
# Full forward (post-backbone), matching AAAI_ADD_STANDARD_GCN.forward.
# ----------------------------------------------------------------------------
def aaai_add_standard_gcn_forward(x_feat, p):
    B, Cf, H, W = x_feat.shape
    xf = x_feat.reshape(B, Cf, H * W)

    N = p["static_adj"].shape[0]
    D = p["w_tr"].shape[0]
    Dout = p["dynamic_weight"].shape[1]
    assert D == Dout, "residual v + z^T requires in_features == out_features"

    # --- tiny weight prep / static-adjacency normalization (XLA glue) -------
    w_cat = jnp.concatenate([p["w_fc"], p["w_tr"]], axis=0)         # (N+D, Cf)
    A = p["static_adj"]
    dv = jnp.sum(A, axis=1) ** -0.5
    adj_norm = dv[:, None] * A.T * dv[None, :]                      # gen_adj
    w_co_g = p["w_co"][:, :D]
    w_co_x = p["w_co"][:, D:]

    # --- Kernel A: SAM + out1 + static GCN + gap ----------------------------
    out1, vT, h, xglb = run_sam_static(xf, w_cat, p["b_tr"], adj_norm,
                                       p["static_weight"], N)

    # --- global branch: conv_global + BatchNorm1d(train stats) + LeakyReLU --
    # Cross-batch BN on a (B, D) tensor: cheaper as plain XLA than a kernel.
    y = xglb @ p["w_g"].T + p["b_g"]
    mu = jnp.mean(y, axis=0, keepdims=True)
    var = jnp.mean((y - mu) ** 2, axis=0, keepdims=True)             # biased
    g = _leaky((y - mu) * lax.rsqrt(var + BN_EPS) * p["bn_gamma"]
               + p["bn_beta"])                                       # (B, D)

    # --- Kernel B: dynamic graph + dynamic GCN + head ------------------------
    out2 = run_dyn_head(h, vT, g[:, None, :], w_co_g, w_co_x, p["b_co"],
                        A, p["dynamic_weight"], p["w_last"], p["b_last"])
    return out1, out2


def init_params(key, num_classes, in_features, out_features, c_feat):
    ks = jax.random.split(key, 12)

    def u(k, shape, s):
        return jax.random.uniform(k, shape, jnp.float32, -s, s)

    static_stdv = 1.0 / math.sqrt(in_features)
    dynamic_stdv = 1.0 / math.sqrt(out_features)
    return dict(
        # synthetic positive adjacency (stands in for adjList)
        static_adj=jax.random.uniform(ks[0], (num_classes, num_classes),
                                      jnp.float32, 0.1, 1.0),
        static_weight=u(ks[1], (in_features, in_features), static_stdv),
        dynamic_weight=u(ks[2], (in_features, out_features), dynamic_stdv),
        w_fc=u(ks[3], (num_classes, c_feat), 1.0 / math.sqrt(c_feat)),
        w_tr=u(ks[4], (in_features, c_feat), 1.0 / math.sqrt(c_feat)),
        b_tr=u(ks[5], (in_features, 1), 1.0 / math.sqrt(c_feat)),
        w_g=u(ks[6], (in_features, in_features), 1.0 / math.sqrt(in_features)),
        b_g=u(ks[7], (in_features,), 1.0 / math.sqrt(in_features)),
        bn_gamma=jnp.ones((in_features,), jnp.float32),
        bn_beta=jnp.zeros((in_features,), jnp.float32),
        w_co=u(ks[8], (num_classes, 2 * in_features),
               1.0 / math.sqrt(2 * in_features)),
        b_co=u(ks[9], (num_classes, 1), 1.0 / math.sqrt(2 * in_features)),
        w_last=u(ks[10], (num_classes, out_features),
                 1.0 / math.sqrt(out_features)),
        b_last=u(ks[11], (num_classes, 1), 1.0 / math.sqrt(out_features)),
    )


if __name__ == "__main__":
    B, C_FEAT, H, W = 2, 64, 8, 8        # C_FEAT stands in for the ResNet's 2048
    NUM_CLASSES, IN_FEAT, OUT_FEAT = 8, 32, 32

    key = jax.random.PRNGKey(0)
    k_x, k_p = jax.random.split(key)
    x_feat = jax.random.normal(k_x, (B, C_FEAT, H, W), jnp.float32)
    params = init_params(k_p, NUM_CLASSES, IN_FEAT, OUT_FEAT, C_FEAT)

    out1, out2 = aaai_add_standard_gcn_forward(x_feat, params)
    jax.block_until_ready((out1, out2))
    assert out1.shape == (B, NUM_CLASSES) and out2.shape == (B, NUM_CLASSES)
    print("KERNEL_OK")
</pallas_src>

<mosaic_0001>
module attributes {stable_mosaic.version = 11 : i64} {
  func.func @sam_static_kernel(%arg0: i32, %arg1: memref<1x64x64xf32, #tpu.memory_space<vmem>>, %arg2: memref<40x64xf32, #tpu.memory_space<vmem>>, %arg3: memref<32x1xf32, #tpu.memory_space<vmem>>, %arg4: memref<8x8xf32, #tpu.memory_space<vmem>>, %arg5: memref<32x32xf32, #tpu.memory_space<vmem>>, %arg6: memref<1x8x1xf32, #tpu.memory_space<vmem>>, %arg7: memref<1x8x32xf32, #tpu.memory_space<vmem>>, %arg8: memref<1x8x32xf32, #tpu.memory_space<vmem>>, %arg9: memref<1x1x32xf32, #tpu.memory_space<vmem>>) attributes {dimension_semantics = [#tpu.dimension_semantics<parallel>], iteration_bounds = array<i64: 2>, scalar_prefetch = 0 : i64, scratch_operands = 0 : i64, tpu.core_type = #tpu.core_type<tc>, window_params = [{transform_indices = @transform_0, window_bounds = array<i64: 1, 64, 64>}, {pipeline_mode = #tpu.pipeline_mode<synchronous>, transform_indices = @transform_1, window_bounds = array<i64: 40, 64>}, {pipeline_mode = #tpu.pipeline_mode<synchronous>, transform_indices = @transform_2, window_bounds = array<i64: 32, 1>}, {pipeline_mode = #tpu.pipeline_mode<synchronous>, transform_indices = @transform_3, window_bounds = array<i64: 8, 8>}, {pipeline_mode = #tpu.pipeline_mode<synchronous>, transform_indices = @transform_4, window_bounds = array<i64: 32, 32>}, {transform_indices = @transform_5, window_bounds = array<i64: 1, 8, 1>}, {transform_indices = @transform_6, window_bounds = array<i64: 1, 8, 32>}, {transform_indices = @transform_7, window_bounds = array<i64: 1, 8, 32>}, {transform_indices = @transform_8, window_bounds = array<i64: 1, 1, 32>}]} {
    %c0 = arith.constant 0 : index
    %c0_0 = arith.constant 0 : index
    %c0_1 = arith.constant 0 : index
    %0 = vector.load %arg1[%c0, %c0_0, %c0_1] : memref<1x64x64xf32, #tpu.memory_space<vmem>>, vector<1x64x64xf32>
    %1 = vector.shape_cast %0 : vector<1x64x64xf32> to vector<64x64xf32>
    %c0_2 = arith.constant 0 : index
    %c0_3 = arith.constant 0 : index
    %2 = vector.load %arg2[%c0_2, %c0_3] : memref<40x64xf32, #tpu.memory_space<vmem>>, vector<40x64xf32>
    %cst = arith.constant dense<0.000000e+00> : vector<40x64xf32>
    %3 = tpu.matmul %2, %1, %cst {dimension_numbers = #tpu.dot_dimension_numbers<[1], [0], [0], [1], [0, 0, 1, 1], [], []>} : vector<40x64xf32>, vector<64x64xf32>, vector<40x64xf32> -> vector<40x64xf32>
    %4 = vector.extract_strided_slice %3 {offsets = [0, 0], sizes = [8, 64], strides = [1, 1]} : vector<40x64xf32> to vector<8x64xf32>
    %cst_4 = arith.constant dense<0xFF800000> : vector<8xf32>
    %5 = vector.multi_reduction <maximumf>, %4, %cst_4 [1] : vector<8x64xf32> to vector<8xf32>
    %6 = vector.shape_cast %5 : vector<8xf32> to vector<8x1xf32>
    %c0_5 = arith.constant 0 : index
    %c0_6 = arith.constant 0 : index
    %c0_7 = arith.constant 0 : index
    %7 = vector.load %arg6[%c0_5, %c0_6, %c0_7] : memref<1x8x1xf32, #tpu.memory_space<vmem>>, vector<1x8x1xf32>
    %8 = vector.shape_cast %7 : vector<1x8x1xf32> to vector<8x1xf32>
    %9 = vector.shape_cast %6 : vector<8x1xf32> to vector<1x8x1xf32>
    tpu.vector_store %arg6[%c0_5, %c0_6, %c0_7], %9 {strides = array<i32>} : memref<1x8x1xf32, #tpu.memory_space<vmem>>, vector<1x8x1xf32>,
    %10 = arith.negf %4 : vector<8x64xf32>
    %11 = math.exp %10 : vector<8x64xf32>
    %cst_8 = arith.constant 1.000000e+00 : f32
    %12 = vector.broadcast %cst_8 : f32 to vector<8x64xf32>
    %13 = arith.addf %12, %11 : vector<8x64xf32>
    %14 = arith.divf %12, %13 : vector<8x64xf32>
    %15 = vector.extract_strided_slice %3 {offsets = [8, 0], sizes = [32, 64], strides = [1, 1]} : vector<40x64xf32> to vector<32x64xf32>
    %c0_9 = arith.constant 0 : index
    %c0_10 = arith.constant 0 : index
    %16 = vector.load %arg3[%c0_9, %c0_10] : memref<32x1xf32, #tpu.memory_space<vmem>>, vector<32x1xf32>
    %17 = vector.broadcast %16 : vector<32x1xf32> to vector<32x64xf32>
    %18 = arith.addf %15, %17 : vector<32x64xf32>
    %cst_11 = arith.constant dense<0.000000e+00> : vector<8x32xf32>
    %19 = tpu.matmul %14, %18, %cst_11 {dimension_numbers = #tpu.dot_dimension_numbers<[1], [1], [0], [0], [0, 0, 1, 0], [], []>} : vector<8x64xf32>, vector<32x64xf32>, vector<8x32xf32> -> vector<8x32xf32>
    %c0_12 = arith.constant 0 : index
    %c0_13 = arith.constant 0 : index
    %c0_14 = arith.constant 0 : index
    %20 = vector.load %arg7[%c0_12, %c0_13, %c0_14] : memref<1x8x32xf32, #tpu.memory_space<vmem>>, vector<1x8x32xf32>
    %21 = vector.shape_cast %20 : vector<1x8x32xf32> to vector<8x32xf32>
    %22 = vector.shape_cast %19 : vector<8x32xf32> to vector<1x8x32xf32>
    tpu.vector_store %arg7[%c0_12, %c0_13, %c0_14], %22 {strides = array<i32>} : memref<1x8x32xf32, #tpu.memory_space<vmem>>, vector<1x8x32xf32>,
    %c0_15 = arith.constant 0 : index
    %c0_16 = arith.constant 0 : index
    %23 = vector.load %arg4[%c0_15, %c0_16] : memref<8x8xf32, #tpu.memory_space<vmem>>, vector<8x8xf32>
    %cst_17 = arith.constant dense<0.000000e+00> : vector<8x32xf32>
    %24 = tpu.matmul %23, %19, %cst_17 {dimension_numbers = #tpu.dot_dimension_numbers<[1], [0], [0], [1], [0, 0, 1, 1], [], []>} : vector<8x8xf32>, vector<8x32xf32>, vector<8x32xf32> -> vector<8x32xf32>
    %cst_18 = arith.constant 0.000000e+00 : f32
    %25 = vector.broadcast %cst_18 : f32 to vector<8x32xf32>
    %26 = arith.cmpf oge, %24, %25 : vector<8x32xf32>
    %cst_19 = arith.constant 2.000000e-01 : f32
    %27 = vector.broadcast %cst_19 : f32 to vector<8x32xf32>
    %28 = arith.mulf %27, %24 : vector<8x32xf32>
    %29 = arith.select %26, %24, %28 : vector<8x32xi1>, vector<8x32xf32>
    %c0_20 = arith.constant 0 : index
    %c0_21 = arith.constant 0 : index
    %30 = vector.load %arg5[%c0_20, %c0_21] : memref<32x32xf32, #tpu.memory_space<vmem>>, vector<32x32xf32>
    %cst_22 = arith.constant dense<0.000000e+00> : vector<8x32xf32>
    %31 = tpu.matmul %29, %30, %cst_22 {dimension_numbers = #tpu.dot_dimension_numbers<[1], [0], [0], [1], [0, 0, 1, 1], [], []>} : vector<8x32xf32>, vector<32x32xf32>, vector<8x32xf32> -> vector<8x32xf32>
    %32 = arith.addf %19, %31 : vector<8x32xf32>
    %c0_23 = arith.constant 0 : index
    %c0_24 = arith.constant 0 : index
    %c0_25 = arith.constant 0 : index
    %33 = vector.load %arg8[%c0_23, %c0_24, %c0_25] : memref<1x8x32xf32, #tpu.memory_space<vmem>>, vector<1x8x32xf32>
    %34 = vector.shape_cast %33 : vector<1x8x32xf32> to vector<8x32xf32>
    %35 = vector.shape_cast %32 : vector<8x32xf32> to vector<1x8x32xf32>
    tpu.vector_store %arg8[%c0_23, %c0_24, %c0_25], %35 {strides = array<i32>} : memref<1x8x32xf32, #tpu.memory_space<vmem>>, vector<1x8x32xf32>,
    %cst_26 = arith.constant dense<0.000000e+00> : vector<32xf32>
    %36 = vector.multi_reduction <add>, %32, %cst_26 [0] : vector<8x32xf32> to vector<32xf32>
    %37 = vector.shape_cast %36 : vector<32xf32> to vector<1x32xf32>
    %cst_27 = arith.constant 8.000000e+00 : f32
    %38 = vector.broadcast %cst_27 : f32 to vector<1x32xf32>
    %39 = arith.divf %37, %38 : vector<1x32xf32>
    %c0_28 = arith.constant 0 : index
    %c0_29 = arith.constant 0 : index
    %c0_30 = arith.constant 0 : index
    %40 = vector.load %arg9[%c0_28, %c0_29, %c0_30] : memref<1x1x32xf32, #tpu.memory_space<vmem>>, vector<1x1x32xf32>
    %41 = vector.shape_cast %40 : vector<1x1x32xf32> to vector<1x32xf32>
    %42 = vector.shape_cast %39 : vector<1x32xf32> to vector<1x1x32xf32>
    tpu.vector_store %arg9[%c0_28, %c0_29, %c0_30], %42 {strides = array<i32>} : memref<1x1x32xf32, #tpu.memory_space<vmem>>, vector<1x1x32xf32>,
    return
  }
  func.func @transform_0(%arg0: i32) -> (i32, i32, i32) {
    %c0_i32 = arith.constant 0 : i32
    %c0_i32_0 = arith.constant 0 : i32
    %c0_i32_1 = arith.constant 0 : i32
    return %arg0, %c0_i32, %c0_i32_0 : i32, i32, i32
  }
  func.func @transform_1(%arg0: i32) -> (i32, i32) {
    %c0_i32 = arith.constant 0 : i32
    %c0_i32_0 = arith.constant 0 : i32
    %c0_i32_1 = arith.constant 0 : i32
    return %c0_i32, %c0_i32_0 : i32, i32
  }
  func.func @transform_2(%arg0: i32) -> (i32, i32) {
    %c0_i32 = arith.constant 0 : i32
    %c0_i32_0 = arith.constant 0 : i32
    %c0_i32_1 = arith.constant 0 : i32
    return %c0_i32, %c0_i32_0 : i32, i32
  }
  func.func @transform_3(%arg0: i32) -> (i32, i32) {
    %c0_i32 = arith.constant 0 : i32
    %c0_i32_0 = arith.constant 0 : i32
    %c0_i32_1 = arith.constant 0 : i32
    return %c0_i32, %c0_i32_0 : i32, i32
  }
  func.func @transform_4(%arg0: i32) -> (i32, i32) {
    %c0_i32 = arith.constant 0 : i32
    %c0_i32_0 = arith.constant 0 : i32
    %c0_i32_1 = arith.constant 0 : i32
    return %c0_i32, %c0_i32_0 : i32, i32
  }
  func.func @transform_5(%arg0: i32) -> (i32, i32, i32) {
    %c0_i32 = arith.constant 0 : i32
    %c0_i32_0 = arith.constant 0 : i32
    %c0_i32_1 = arith.constant 0 : i32
    return %arg0, %c0_i32, %c0_i32_0 : i32, i32, i32
  }
  func.func @transform_6(%arg0: i32) -> (i32, i32, i32) {
    %c0_i32 = arith.constant 0 : i32
    %c0_i32_0 = arith.constant 0 : i32
    %c0_i32_1 = arith.constant 0 : i32
    return %arg0, %c0_i32, %c0_i32_0 : i32, i32, i32
  }
  func.func @transform_7(%arg0: i32) -> (i32, i32, i32) {
    %c0_i32 = arith.constant 0 : i32
    %c0_i32_0 = arith.constant 0 : i32
    %c0_i32_1 = arith.constant 0 : i32
    return %arg0, %c0_i32, %c0_i32_0 : i32, i32, i32
  }
  func.func @transform_8(%arg0: i32) -> (i32, i32, i32) {
    %c0_i32 = arith.constant 0 : i32
    %c0_i32_0 = arith.constant 0 : i32
    %c0_i32_1 = arith.constant 0 : i32
    return %arg0, %c0_i32, %c0_i32_0 : i32, i32, i32
  }
}

</mosaic_0001>

<llo_original>
// kernel: tpu_custom_call.1
$region0: #{tpu_custom_call.1}
  #allocation0 [shape = 'u32[]', space=smem, size = 0x4, offset = 0x4, fixed_abs, tag = 'smem constant byte address 0x4 - core index']
  #allocation1 [shape = 'u32[144,128]{1,0:T(1,128)}', space=vmem, size = 0x12000, scoped, tag = 'internal scratch']
  %s0 = inlined_call_operand.hbm [shape: f32[2,64,64], index: 0, kind: input, shape index: {}]
  %s1 = inlined_call_operand.hbm [shape: f32[40,64], index: 1, kind: input, shape index: {}]
  %s2 = inlined_call_operand.vmem [shape: f32[32,1], index: 2, kind: input, shape index: {}]
  %s3 = inlined_call_operand.vmem [shape: f32[8,8], index: 3, kind: input, shape index: {}]
  %s4 = inlined_call_operand.vmem [shape: f32[32,32], index: 4, kind: input, shape index: {}]
  %s5 = inlined_call_operand.vmem [shape: f32[2,8,1], index: 5, kind: output, shape index: {0}]
  %s6 = inlined_call_operand.hbm [shape: f32[2,8,32], index: 6, kind: output, shape index: {1}]
  %s7 = inlined_call_operand.hbm [shape: f32[2,8,32], index: 7, kind: output, shape index: {2}]
  %s8 = inlined_call_operand.hbm [shape: f32[2,1,32], index: 8, kind: output, shape index: {3}]
  %9 = xla_tuple %s5, %s6, %s7, %s8
  %s10 = sld [smem:[#allocation0]]
  $region85: #{tpu_custom_call.1} parent=0
    _
  %s12 = ssub.s32 1, %s10
  %s13 = scalar_select 0, %s12, %s10
  $region1: #{tpu_custom_call.1} parent=0
    #allocation2 [shape = 'u8[65536]{0}', space=vmem, size = 0x10000, scoped, tag = 'input window, operand 0']
    #allocation3 [shape = 's32[2]{0}', space=sflag, size = 0x8, scoped, tag = 'scoped memory for tpu_custom_call.1']
    #allocation4 [shape = 's32[2]{0}', space=sflag, size = 0x8, scoped, tag = 'scoped memory for tpu_custom_call.1']
    #allocation5 [shape = 'u8[20480]{0}', space=vmem, size = 0x5000, scoped, tag = 'input window, operand 1, single buffered']
    #allocation6 [shape = 's32[1]{0}', space=sflag, size = 0x4, scoped, tag = 'scoped memory for tpu_custom_call.1']
    #allocation7 [shape = 'u8[8192]{0}', space=vmem, size = 0x2000, scoped, tag = 'output window, operand 1']
    #allocation8 [shape = 'u8[8192]{0}', space=vmem, size = 0x2000, scoped, tag = 'output window, operand 2']
    #allocation9 [shape = 's32[2]{0}', space=sflag, size = 0x8, scoped, tag = 'scoped memory for tpu_custom_call.1']
    #allocation10 [shape = 'u8[1024]{0}', space=vmem, size = 0x400, scoped, tag = 'output window, operand 3']
    %14 = vsyncpa [#allocation3], 0
    %s15 = scalar_lea.sflag [#allocation3], 1
    %16 = vsyncpa %s15, 0
    %17 = vsyncpa [#allocation6], 0
    %18 = vsyncpa [#allocation4], 0
    %s19 = scalar_lea.sflag [#allocation4], 1
    %20 = vsyncpa %s19, 0
    %21 = vsyncpa [#allocation9], 0
    %s22 = scalar_lea.sflag [#allocation9], 1
    %23 = vsyncpa %s22, 0
    loop: start=0, step=1, limit=4
    $region2: #{tpu_custom_call.1} parent=1 // loop_pre_header
      _
    $region3: #{tpu_custom_call.1} parent=1 // loop_header
      %s25 = sphi 0, %s29
      %p26 = scmp.ge.s32.totalorder %s25, 4
      %s35 = sphi 0, %s37
      %s38 = sphi 0, %s35
      %s39 = sphi 0, %s38
      %s55 = sphi 0, %s39
      %s59 = sphi 0, %s59
      %s61 = sphi 0, %s59
      %s62 = sphi 0, %s61
      %s76 = sphi 0, %s62
      %s80 = sphi 0, %s80
      %s82 = sphi 0, %s80
      %s83 = sphi 0, %s82
      %s97 = sphi 0, %s83
      %s101 = sphi 0, %s101
      %s103 = sphi 0, %s101
      %s104 = sphi 0, %s103
      %s118 = sphi 0, %s104
      %s122 = sphi 0, %s122
      %s124 = sphi 0, %s122
      %s125 = sphi 0, %s124
      %s139 = sphi 0, %s125
      %s145 = sphi 0, %s147
      %s148 = sphi 0, %s145
      %s149 = sphi 0, %s148
      %s165 = sphi 0, %s149
      %s171 = sphi 0, %s173
      %s174 = sphi 0, %s171
      %s175 = sphi 0, %s174
      %s191 = sphi 0, %s175
      %s197 = sphi 0, %s199
      %s200 = sphi 0, %s197
      %s201 = sphi 0, %s200
      %s217 = sphi 0, %s201
      %s223 = sphi 0, %s225
      %s226 = sphi 0, %s223
      %s227 = sphi 0, %s226
      %s243 = sphi 0, %s227
    $region4: #{tpu_custom_call.1} parent=1 // loop_header_branch
      %28 = sbr.rel (%p26) target = $region8
    $region5: #{tpu_custom_call.1} parent=1 // loop_body
      %s30 = ssub.s32 %s25, 1
      %s31 = ssub.s32 %s25, 2
      %s32 = sadd.s32 %s25, 1
      %s33 = ssub.s32 %s25, %s32
      %p34 = scmp.eq.s32.totalorder %s33, 0
      %s36 = sadd.s32 %s35, 1
      %s37 = scalar_select %p34, %s35, %s36
      %p40 = pneg %p34
      %p41 = scmp.eq.s32.totalorder %s25, 1
      %p42 = por %p40, %p41
      %p43 = scmp.ne.s32.totalorder %s35, %s38
      %p44 = scmp.eq.s32.totalorder %s25, 0
      %p45 = por %p43, %p44
      %p46 = scmp.ne.s32.totalorder %s35, %s38
      %p47 = scmp.eq.s32.totalorder %s30, 1
      %p48 = por %p46, %p47
      %p49 = scmp.ne.s32.totalorder %s38, %s39
      %p50 = scmp.eq.s32.totalorder %s30, 0
      %p51 = por %p49, %p50
      %p52 = scmp.ne.s32.totalorder %s38, %s39
      %p53 = scmp.eq.s32.totalorder %s31, 1
      %p54 = por %p52, %p53
      %p56 = scmp.ne.s32.totalorder %s39, %s55
      %p57 = scmp.eq.s32.totalorder %s31, 0
      %p58 = por %p56, %p57
      %s60 = sadd.s32 %s59, 1
      %p63 = scmp.eq.s32.totalorder %s25, 1
      %p64 = scmp.ne.s32.totalorder %s59, %s61
      %p65 = scmp.eq.s32.totalorder %s25, 0
      %p66 = por %p64, %p65
      %p67 = scmp.ne.s32.totalorder %s59, %s61
      %p68 = scmp.eq.s32.totalorder %s30, 1
      %p69 = por %p67, %p68
      %p70 = scmp.ne.s32.totalorder %s61, %s62
      %p71 = scmp.eq.s32.totalorder %s30, 0
      %p72 = por %p70, %p71
      %p73 = scmp.ne.s32.totalorder %s61, %s62
      %p74 = scmp.eq.s32.totalorder %s31, 1
      %p75 = por %p73, %p74
      %p77 = scmp.ne.s32.totalorder %s62, %s76
      %p78 = scmp.eq.s32.totalorder %s31, 0
      %p79 = por %p77, %p78
      %s81 = sadd.s32 %s80, 1
      %p84 = scmp.eq.s32.totalorder %s25, 1
      %p85 = scmp.ne.s32.totalorder %s80, %s82
      %p86 = scmp.eq.s32.totalorder %s25, 0
      %p87 = por %p85, %p86
      %p88 = scmp.ne.s32.totalorder %s80, %s82
      %p89 = scmp.eq.s32.totalorder %s30, 1
      %p90 = por %p88, %p89
      %p91 = scmp.ne.s32.totalorder %s82, %s83
      %p92 = scmp.eq.s32.totalorder %s30, 0
      %p93 = por %p91, %p92
      %p94 = scmp.ne.s32.totalorder %s82, %s83
      %p95 = scmp.eq.s32.totalorder %s31, 1
      %p96 = por %p94, %p95
      %p98 = scmp.ne.s32.totalorder %s83, %s97
      %p99 = scmp.eq.s32.totalorder %s31, 0
      %p100 = por %p98, %p99
      %s102 = sadd.s32 %s101, 1
      %p105 = scmp.eq.s32.totalorder %s25, 1
      %p106 = scmp.ne.s32.totalorder %s101, %s103
      %p107 = scmp.eq.s32.totalorder %s25, 0
      %p108 = por %p106, %p107
      %p109 = scmp.ne.s32.totalorder %s101, %s103
      %p110 = scmp.eq.s32.totalorder %s30, 1
      %p111 = por %p109, %p110
      %p112 = scmp.ne.s32.totalorder %s103, %s104
      %p113 = scmp.eq.s32.totalorder %s30, 0
      %p114 = por %p112, %p113
      %p115 = scmp.ne.s32.totalorder %s103, %s104
      %p116 = scmp.eq.s32.totalorder %s31, 1
      %p117 = por %p115, %p116
      %p119 = scmp.ne.s32.totalorder %s104, %s118
      %p120 = scmp.eq.s32.totalorder %s31, 0
      %p121 = por %p119, %p120
      %s123 = sadd.s32 %s122, 1
      %p126 = scmp.eq.s32.totalorder %s25, 1
      %p127 = scmp.ne.s32.totalorder %s122, %s124
      %p128 = scmp.eq.s32.totalorder %s25, 0
      %p129 = por %p127, %p128
      %p130 = scmp.ne.s32.totalorder %s122, %s124
      %p131 = scmp.eq.s32.totalorder %s30, 1
      %p132 = por %p130, %p131
      %p133 = scmp.ne.s32.totalorder %s124, %s125
      %p134 = scmp.eq.s32.totalorder %s30, 0
      %p135 = por %p133, %p134
      %p136 = scmp.ne.s32.totalorder %s124, %s125
      %p137 = scmp.eq.s32.totalorder %s31, 1
      %p138 = por %p136, %p137
      %p140 = scmp.ne.s32.totalorder %s125, %s139
      %p141 = scmp.eq.s32.totalorder %s31, 0
      %p142 = por %p140, %p141
      %s143 = ssub.s32 %s25, %s32
      %p144 = scmp.eq.s32.totalorder %s143, 0
      %s146 = sadd.s32 %s145, 1
      %s147 = scalar_select %p144, %s145, %s146
      %p150 = pneg %p144
      %p151 = scmp.eq.s32.totalorder %s25, 1
      %p152 = por %p150, %p151
      %p153 = scmp.ne.s32.totalorder %s145, %s148
      %p154 = scmp.eq.s32.totalorder %s25, 0
      %p155 = por %p153, %p154
      %p156 = scmp.ne.s32.totalorder %s145, %s148
      %p157 = scmp.eq.s32.totalorder %s30, 1
      %p158 = por %p156, %p157
      %p159 = scmp.ne.s32.totalorder %s148, %s149
      %p160 = scmp.eq.s32.totalorder %s30, 0
      %p161 = por %p159, %p160
      %p162 = scmp.ne.s32.totalorder %s148, %s149
      %p163 = scmp.eq.s32.totalorder %s31, 1
      %p164 = por %p162, %p163
      %p166 = scmp.ne.s32.totalorder %s149, %s165
      %p167 = scmp.eq.s32.totalorder %s31, 0
      %p168 = por %p166, %p167
      %s169 = ssub.s32 %s25, %s32
      %p170 = scmp.eq.s32.totalorder %s169, 0
      %s172 = sadd.s32 %s171, 1
      %s173 = scalar_select %p170, %s171, %s172
      %p176 = pneg %p170
      %p177 = scmp.eq.s32.totalorder %s25, 1
      %p178 = por %p176, %p177
      %p179 = scmp.ne.s32.totalorder %s171, %s174
      %p180 = scmp.eq.s32.totalorder %s25, 0
      %p181 = por %p179, %p180
      %p182 = scmp.ne.s32.totalorder %s171, %s174
      %p183 = scmp.eq.s32.totalorder %s30, 1
      %p184 = por %p182, %p183
      %p185 = scmp.ne.s32.totalorder %s174, %s175
      %p186 = scmp.eq.s32.totalorder %s30, 0
      %p187 = por %p185, %p186
      %p188 = scmp.ne.s32.totalorder %s174, %s175
      %p189 = scmp.eq.s32.totalorder %s31, 1
      %p190 = por %p188, %p189
      %p192 = scmp.ne.s32.totalorder %s175, %s191
      %p193 = scmp.eq.s32.totalorder %s31, 0
      %p194 = por %p192, %p193
      %s195 = ssub.s32 %s25, %s32
      %p196 = scmp.eq.s32.totalorder %s195, 0
      %s198 = sadd.s32 %s197, 1
      %s199 = scalar_select %p196, %s197, %s198
      %p202 = pneg %p196
      %p203 = scmp.eq.s32.totalorder %s25, 1
      %p204 = por %p202, %p203
      %p205 = scmp.ne.s32.totalorder %s197, %s200
      %p206 = scmp.eq.s32.totalorder %s25, 0
      %p207 = por %p205, %p206
      %p208 = scmp.ne.s32.totalorder %s197, %s200
      %p209 = scmp.eq.s32.totalorder %s30, 1
      %p210 = por %p208, %p209
      %p211 = scmp.ne.s32.totalorder %s200, %s201
      %p212 = scmp.eq.s32.totalorder %s30, 0
      %p213 = por %p211, %p212
      %p214 = scmp.ne.s32.totalorder %s200, %s201
      %p215 = scmp.eq.s32.totalorder %s31, 1
      %p216 = por %p214, %p215
      %p218 = scmp.ne.s32.totalorder %s201, %s217
      %p219 = scmp.eq.s32.totalorder %s31, 0
      %p220 = por %p218, %p219
      %s221 = ssub.s32 %s25, %s32
      %p222 = scmp.eq.s32.totalorder %s221, 0
      %s224 = sadd.s32 %s223, 1
      %s225 = scalar_select %p222, %s223, %s224
      %p228 = pneg %p222
      %p229 = scmp.eq.s32.totalorder %s25, 1
      %p230 = por %p228, %p229
      %p231 = scmp.ne.s32.totalorder %s223, %s226
      %p232 = scmp.eq.s32.totalorder %s25, 0
      %p233 = por %p231, %p232
      %p234 = scmp.ne.s32.totalorder %s223, %s226
      %p235 = scmp.eq.s32.totalorder %s30, 1
      %p236 = por %p234, %p235
      %p237 = scmp.ne.s32.totalorder %s226, %s227
      %p238 = scmp.eq.s32.totalorder %s30, 0
      %p239 = por %p237, %p238
      %p240 = scmp.ne.s32.totalorder %s226, %s227
      %p241 = scmp.eq.s32.totalorder %s31, 1
      %p242 = por %p240, %p241
      %p244 = scmp.ne.s32.totalorder %s227, %s243
      %p245 = scmp.eq.s32.totalorder %s31, 0
      %p246 = por %p244, %p245
      %p247 = scmp.le.s32.totalorder 1, %s25
      %p248 = scmp.lt.s32.totalorder %s25, 3
      %p249 = pnand %p247, %p248
      %p250 = pneg %p249
      // Predicated region
      $region9: #{tpu_custom_call.1} parent=5 // pred_check
        _
      $region10: #{tpu_custom_call.1} parent=5 // pred_check_branch
        %252 = sbr.rel (%p249) target = $region12
      $region11: #{tpu_custom_call.1} parent=5 // pred_region
        %s253 = ssub.s32 %s25, 1
        // Predicated region
        $region13: #{tpu_custom_call.1} parent=11 // pred_check
          %p254 = pneg %p72
        $region14: #{tpu_custom_call.1} parent=11 // pred_check_branch
          %256 = sbr.rel (%p254) target = $region16
        $region15: #{tpu_custom_call.1} parent=11 // pred_region
          %s258 = ssub.s32 640, 640
          %259 = vsyncadd [#allocation6], %s258
          %s260 = sshll.u32 [#allocation5], 4
          %s261 = int_to_ptr.vmem [resolvable:$true] %s260
          %266 = dma.hbm_to_vmem [thread:$0]  %s1, 640, %s261, [#allocation6], 128, 128, 8
        $region16: #{tpu_custom_call.1} parent=11 // pred_fallthru
          _
        // Predicated region
        $region17: #{tpu_custom_call.1} parent=11 // pred_check
          %p267 = pneg %p93
        $region18: #{tpu_custom_call.1} parent=11 // pred_check_branch
          %269 = sbr.rel (%p267) target = $region20
        $region19: #{tpu_custom_call.1} parent=11 // pred_region
          _
        $region20: #{tpu_custom_call.1} parent=11 // pred_fallthru
          _
        // Predicated region
        $region21: #{tpu_custom_call.1} parent=11 // pred_check
          %p270 = pneg %p114
        $region22: #{tpu_custom_call.1} parent=11 // pred_check_branch
          %272 = sbr.rel (%p270) target = $region24
        $region23: #{tpu_custom_call.1} parent=11 // pred_region
          _
        $region24: #{tpu_custom_call.1} parent=11 // pred_fallthru
          _
        // Predicated region
        $region25: #{tpu_custom_call.1} parent=11 // pred_check
          %p273 = pneg %p135
        $region26: #{tpu_custom_call.1} parent=11 // pred_check_branch
          %275 = sbr.rel (%p273) target = $region28
        $region27: #{tpu_custom_call.1} parent=11 // pred_region
          _
        $region28: #{tpu_custom_call.1} parent=11 // pred_fallthru
          _
      $region12: #{tpu_custom_call.1} parent=5 // pred_fallthru
        _
      %p276 = scmp.lt.s32.totalorder %s25, 2
      // Predicated region
      $region29: #{tpu_custom_call.1} parent=5 // pred_check
        %p277 = pneg %p276
      $region30: #{tpu_custom_call.1} parent=5 // pred_check_branch
        %279 = sbr.rel (%p277) target = $region32
      $region31: #{tpu_custom_call.1} parent=5 // pred_region
        // Predicated region
        $region33: #{tpu_custom_call.1} parent=31 // pred_check
          %p280 = pneg %p45
        $region34: #{tpu_custom_call.1} parent=31 // pred_check_branch
          %282 = sbr.rel (%p280) target = $region36
        $region35: #{tpu_custom_call.1} parent=31 // pred_region
          %s283 = sand.u32 %s35, 1
          %s284 = scalar_lea.sflag [#allocation3], %s283
          %s285 = sand.u32 %s35, 1
          %s286 = smul.addr %s285, 64
          %s287 = scalar_lea.vmem [#allocation2], %s286
          %s289 = ssub.s32 1024, 1024
          %290 = vsyncadd %s284, %s289
          %s291 = smul.addr %s25, 8
          %s292 = smul.addr %s291, 128
          %s293 = scalar_lea.hbm %s0, %s292
          %s294 = sshll.u32 %s287, 4
          %s295 = int_to_ptr.vmem [resolvable:$true] %s294
          %300 = dma.hbm_to_vmem [thread:$0]  %s293, 1024, %s295, %s284, 128, 128, 8
        $region36: #{tpu_custom_call.1} parent=31 // pred_fallthru
          _
      $region32: #{tpu_custom_call.1} parent=5 // pred_fallthru
        _
      %p301 = scmp.le.s32.totalorder 1, %s25
      %p302 = scmp.lt.s32.totalorder %s25, 3
      %p303 = pnand %p301, %p302
      %p304 = pneg %p303
      // Predicated region
      $region37: #{tpu_custom_call.1} parent=5 // pred_check
        _
      $region38: #{tpu_custom_call.1} parent=5 // pred_check_branch
        %306 = sbr.rel (%p303) target = $region40
      $region39: #{tpu_custom_call.1} parent=5 // pred_region
        %s307 = ssub.s32 %s25, 1
        %s308 = sand.u32 %s38, 1
        %s309 = scalar_lea.sflag [#allocation3], %s308
        %s310 = sand.u32 %s38, 1
        %s311 = smul.addr %s310, 64
        %s312 = scalar_lea.vmem [#allocation2], %s311
        // Predicated region
        $region41: #{tpu_custom_call.1} parent=39 // pred_check
          %p313 = pneg %p51
        $region42: #{tpu_custom_call.1} parent=39 // pred_check_branch
          %315 = sbr.rel (%p313) target = $region44
        $region43: #{tpu_custom_call.1} parent=39 // pred_region
          %316 = dma.done %s309, 1024
        $region44: #{tpu_custom_call.1} parent=39 // pred_fallthru
          _
        // Predicated region
        $region45: #{tpu_custom_call.1} parent=39 // pred_check
          %p317 = pneg %p72
        $region46: #{tpu_custom_call.1} parent=39 // pred_check_branch
          %319 = sbr.rel (%p317) target = $region48
        $region47: #{tpu_custom_call.1} parent=39 // pred_region
          %320 = dma.done [#allocation6], 640
        $region48: #{tpu_custom_call.1} parent=39 // pred_fallthru
          _
        %s321 = sand.u32 %s38, 1
        %s322 = scalar_lea.sflag [#allocation3], %s321
        %s323 = sand.u32 %s38, 1
        %s324 = smul.addr %s323, 64
        %s325 = scalar_lea.vmem [#allocation2], %s324
        %p326 = pneg %p51
        %p327 = pneg %p48
        %p328 = pneg %p72
        %p329 = pneg %p69
        %p330 = pneg %p93
        %p331 = pneg %p90
        %p332 = pneg %p114
        %p333 = pneg %p111
        %p334 = pneg %p135
        %p335 = pneg %p132
        %p336 = pneg %p161
        %p337 = pneg %p158
        %p338 = scmp.lt.s32.totalorder %s30, 1
        %s339 = scalar_select %p338, %s30, 1
        %s340 = smul.addr %s339, 8
        %s341 = scalar_lea.vmem %s5, %s340
        %p342 = pneg %p187
        %p343 = pneg %p184
        %s344 = sand.u32 %s174, 1
        %s345 = scalar_lea.sflag [#allocation4], %s344
        %s346 = sand.u32 %s174, 1
        %s347 = smul.addr %s346, 8
        %s348 = scalar_lea.vmem [#allocation7], %s347
        %p349 = pneg %p213
        %p350 = pneg %p210
        %s351 = sand.u32 %s30, 1
        %s352 = scalar_lea.sflag [#allocation9], %s351
        %s353 = sand.u32 %s200, 1
        %s354 = smul.addr %s353, 8
        %s355 = scalar_lea.vmem [#allocation8], %s354
        %p356 = pneg %p239
        %p357 = pneg %p236
        %s358 = sand.u32 %s30, 1
        %s359 = scalar_lea.sflag [#allocation9], %s358
        %s360 = sand.u32 %s226, 1
        %s361 = scalar_lea.vmem [#allocation10], %s360
        %p362 = scmp.lt.s32.totalorder %s30, 1
        %s363 = scalar_select %p362, %s30, 1
        %s364 = smul.addr %s363, 8
        %s365 = scalar_lea.vmem %s5, %s364
        %v366 = vld [vmem:[%s312] sm:$0xff]
        %v367 = vld [vmem:[%s312 + $0x8] sm:$0xff]
        %v368 = vld [vmem:[%s312 + $0x10] sm:$0xff]
        %v369 = vld [vmem:[%s312 + $0x18] sm:$0xff]
        %v370 = vld [vmem:[%s312 + $0x20] sm:$0xff]
        %v371 = vld [vmem:[%s312 + $0x28] sm:$0xff]
        %v372 = vld [vmem:[%s312 + $0x30] sm:$0xff]
        %v373 = vld [vmem:[%s312 + $0x38] sm:$0xff]
        %v374 = vld [vmem:[#allocation5] sm:$0xff]
        %v375 = vld [vmem:[#allocation5 + $0x8] sm:$0xff]
        %v376 = vld [vmem:[#allocation5 + $0x10] sm:$0xff]
        %v377 = vld [vmem:[#allocation5 + $0x18] sm:$0xff]
        %v378 = vld [vmem:[#allocation5 + $0x20] sm:$0xff]
        %vm379 = vcmask 523264
        %v381 = vsel %vm379, %v374, 0
        %v384 = vsel %vm379, %v375, 0
        %v387 = vsel %vm379, %v376, 0
        %v390 = vsel %vm379, %v377, 0
        %v393 = vsel %vm379, %v378, 0
        %395 = vmatprep.subr.mxu0 0.0
        %396 = vmatpush1.msra.mxu0 %v366
        %397 = vmatprep.subr.mxu0 0.0
        %398 = vmatpush1.msra.mxu0 %v367
        %399 = vmatprep.subr.mxu0 0.0
        %400 = vmatpush1.msra.mxu0 %v368
        %401 = vmatprep.subr.mxu0 0.0
        %402 = vmatpush1.msra.mxu0 %v369
        %403 = vmatprep.subr.mxu0 0.0
        %404 = vmatpush1.msra.mxu0 %v370
        %405 = vmatprep.subr.mxu0 0.0
        %406 = vmatpush1.msra.mxu0 %v371
        %407 = vmatprep.subr.mxu0 0.0
        %408 = vmatpush1.msra.mxu0 %v372
        %409 = vmatprep.subr.mxu0 0.0
        %410 = vmatpush1.msra.mxu0 %v373
        %411 = vmatprep.subr.mxu0 0.0
        %412 = vmatpush1.msra.mxu0 0.0
        %413 = vmatprep.subr.mxu0 0.0
        %414 = vmatpush1.msra.mxu0 0.0
        %415 = vmatprep.subr.mxu0 0.0
        %416 = vmatpush1.msra.mxu0 0.0
        %417 = vmatprep.subr.mxu0 0.0
        %418 = vmatpush1.msra.mxu0 0.0
        %419 = vmatprep.subr.mxu0 0.0
        %420 = vmatpush1.msra.mxu0 0.0
        %421 = vmatprep.subr.mxu0 0.0
        %422 = vmatpush1.msra.mxu0 0.0
        %423 = vmatprep.subr.mxu0 0.0
        %424 = vmatpush1.msra.mxu0 0.0
        %425 = vmatprep.subr.mxu0 0.0
        %426 = vmatpush1.msra.mxu0 0.0
        %427 = vmatprep.subr.mxu0 0.0
        %428 = vmatpush1.msra.mxu0 0.0
        %429 = vmatprep.subr.mxu0 0.0
        %430 = vmatpush1.msra.mxu0 0.0
        %431 = vmatprep.subr.mxu0 0.0
        %432 = vmatpush1.msra.mxu0 0.0
        %433 = vmatprep.subr.mxu0 0.0
        %434 = vmatpush1.msra.mxu0 0.0
        %435 = vmatprep.subr.mxu0 0.0
        %436 = vmatpush1.msra.mxu0 0.0
        %437 = vmatprep.subr.mxu0 0.0
        %438 = vmatpush1.msra.mxu0 0.0
        %439 = vmatprep.subr.mxu0 0.0
        %440 = vmatpush1.msra.mxu0 0.0
        %441 = vmatprep.subr.mxu0 0.0
        %442 = vmatpush1.msra.mxu0 0.0
        %443 = vmatprep.subr.mxu0 0.0
        %444 = vmatpush1.msra.mxu0 0.0
        %445 = vmatprep.subr.mxu0 0.0
        %446 = vmatpush1.msra.mxu0 0.0
        %447 = vmatprep.subr.mxu0 0.0
        %448 = vmatpush1.msra.mxu0 0.0
        %449 = vmatprep.subr.mxu0 0.0
        %450 = vmatpush1.msra.mxu0 0.0
        %451 = vmatprep.subr.mxu0 0.0
        %452 = vmatpush1.msra.mxu0 0.0
        %453 = vmatprep.subr.mxu0 0.0
        %454 = vmatpush1.msra.mxu0 0.0
        %455 = vmatprep.subr.mxu0 0.0
        %456 = vmatpush1.msra.mxu0 0.0
        %457 = vmatprep.subr.mxu0 0.0
        %458 = vmatpush1.msra.mxu0 0.0
        %459 = vmatprep.mubr.f32.mxu0 0.0
        %460 = vmatmul.mubr.f32.gmra.mrb[0].mxu0 %v381
        %v461 = vpop.f32.mrb[0].mxu0
        %v462 = vadd.f32 0.0, %v461
        %v463 = vpop.f32.mrb[0].mxu0
        %464 = vmatprep.mubr.f32.mxu0 0.0
        %465 = vmatmul.mubr.f32.gmra.mrb[0].mxu0 %v384
        %v466 = vpop.f32.mrb[0].mxu0
        %v467 = vadd.f32 0.0, %v466
        %v468 = vpop.f32.mrb[0].mxu0
        %469 = vmatprep.mubr.f32.mxu0 0.0
        %470 = vmatmul.mubr.f32.gmra.mrb[0].mxu0 %v387
        %v471 = vpop.f32.mrb[0].mxu0
        %v472 = vadd.f32 0.0, %v471
        %v473 = vpop.f32.mrb[0].mxu0
        %474 = vmatprep.mubr.f32.mxu0 0.0
        %475 = vmatmul.mubr.f32.gmra.mrb[0].mxu0 %v390
        %v476 = vpop.f32.mrb[0].mxu0
        %v477 = vadd.f32 0.0, %v476
        %v478 = vpop.f32.mrb[0].mxu0
        %479 = vmatprep.mubr.f32.mxu0 0.0
        %480 = vmatmul.mubr.f32.gmra.mrb[0].mxu0 %v393
        %v481 = vpop.f32.mrb[0].mxu0
        %v482 = vadd.f32 0.0, %v481
        %v483 = vpop.f32.mrb[0].mxu0
        %484 = vdwg.mxu0
        %v485 = vsel %vm379, %v462, -inf
        %486 = vmax.xlane.f32.xlu0 %v485
        %v487 = vpop.xlane.xlu0 %486
        %vm488 = vcmask 7168
        %489 = vst.msk [vmem:[%s365] sm:$0xff] %vm488, %v487
        %v490 = vxor.u32 %v462, 2147483648
        %v491 = vmul.f32 %v490, 1.442695
        %v492 = vpow.pop %v491
        %v493 = vadd.f32 %v492, 1.0
        %v494 = vrcp.pop %v493
        %v495 = vmul.f32 1.0, %v494
        %v496 = vld [vmem:[%s2] sm:$0xff]
        %v497 = vld [vmem:[%s2 + $0x8] sm:$0xff]
        %v498 = vld [vmem:[%s2 + $0x10] sm:$0xff]
        %v499 = vld [vmem:[%s2 + $0x18] sm:$0xff]
        %501 = vset.pattern.permute.xlu0 0
        %502 = vperm.xlu0 %501, %v496
        %v503 = vpop.permute.xlu0 %502
        %506 = vset.pattern.permute.xlu0 0
        %507 = vperm.xlu0 %506, %v497
        %v508 = vpop.permute.xlu0 %507
        %511 = vset.pattern.permute.xlu0 0
        %512 = vperm.xlu0 %511, %v498
        %v513 = vpop.permute.xlu0 %512
        %516 = vset.pattern.permute.xlu0 0
        %517 = vperm.xlu0 %516, %v499
        %v518 = vpop.permute.xlu0 %517
        %v520 = vadd.f32 %v467, %v503
        %v521 = vadd.f32 %v472, %v508
        %v522 = vadd.f32 %v477, %v513
        %v523 = vadd.f32 %v482, %v518
        %v525 = vsel %vm379, %v495, 0
        %v528 = vsel %vm379, %v520, 0
        %v531 = vsel %vm379, %v521, 0
        %v534 = vsel %vm379, %v522, 0
        %v537 = vsel %vm379, %v523, 0
        %539 = vmatprep.subr.mxu0 0.0
        %540 = vmatpush1.xpose.msra.mxu0 %v528
        %541 = vmatprep.subr.mxu0 0.0
        %542 = vmatpush1.xpose.msra.mxu0 %v531
        %543 = vmatprep.subr.mxu0 0.0
        %544 = vmatpush1.xpose.msra.mxu0 %v534
        %545 = vmatprep.subr.mxu0 0.0
        %546 = vmatpush1.xpose.msra.mxu0 %v537
        %547 = vmatprep.subr.mxu0 0.0
        %548 = vmatpush1.xpose.msra.mxu0 0.0
        %549 = vmatprep.subr.mxu0 0.0
        %550 = vmatpush1.xpose.msra.mxu0 0.0
        %551 = vmatprep.subr.mxu0 0.0
        %552 = vmatpush1.xpose.msra.mxu0 0.0
        %553 = vmatprep.subr.mxu0 0.0
        %554 = vmatpush1.xpose.msra.mxu0 0.0
        %555 = vmatprep.subr.mxu0 0.0
        %556 = vmatpush1.xpose.msra.mxu0 0.0
        %557 = vmatprep.subr.mxu0 0.0
        %558 = vmatpush1.xpose.msra.mxu0 0.0
        %559 = vmatprep.subr.mxu0 0.0
        %560 = vmatpush1.xpose.msra.mxu0 0.0
        %561 = vmatprep.subr.mxu0 0.0
        %562 = vmatpush1.xpose.msra.mxu0 0.0
        %563 = vmatprep.subr.mxu0 0.0
        %564 = vmatpush1.xpose.msra.mxu0 0.0
        %565 = vmatprep.subr.mxu0 0.0
        %566 = vmatpush1.xpose.msra.mxu0 0.0
        %567 = vmatprep.subr.mxu0 0.0
        %568 = vmatpush1.xpose.msra.mxu0 0.0
        %569 = vmatprep.subr.mxu0 0.0
        %570 = vmatpush1.xpose.msra.mxu0 0.0
        %571 = vmatprep.subr.mxu0 0.0
        %572 = vmatpush1.xpose.msra.mxu0 0.0
        %573 = vmatprep.subr.mxu0 0.0
        %574 = vmatpush1.xpose.msra.mxu0 0.0
        %575 = vmatprep.subr.mxu0 0.0
        %576 = vmatpush1.xpose.msra.mxu0 0.0
        %577 = vmatprep.subr.mxu0 0.0
        %578 = vmatpush1.xpose.msra.mxu0 0.0
        %579 = vmatprep.subr.mxu0 0.0
        %580 = vmatpush1.xpose.msra.mxu0 0.0
        %581 = vmatprep.subr.mxu0 0.0
        %582 = vmatpush1.xpose.msra.mxu0 0.0
        %583 = vmatprep.subr.mxu0 0.0
        %584 = vmatpush1.xpose.msra.mxu0 0.0
        %585 = vmatprep.subr.mxu0 0.0
        %586 = vmatpush1.xpose.msra.mxu0 0.0
        %587 = vmatprep.subr.mxu0 0.0
        %588 = vmatpush1.xpose.msra.mxu0 0.0
        %589 = vmatprep.subr.mxu0 0.0
        %590 = vmatpush1.xpose.msra.mxu0 0.0
        %591 = vmatprep.subr.mxu0 0.0
        %592 = vmatpush1.xpose.msra.mxu0 0.0
        %593 = vmatprep.subr.mxu0 0.0
        %594 = vmatpush1.xpose.msra.mxu0 0.0
        %595 = vmatprep.subr.mxu0 0.0
        %596 = vmatpush1.xpose.msra.mxu0 0.0
        %597 = vmatprep.subr.mxu0 0.0
        %598 = vmatpush1.xpose.msra.mxu0 0.0
        %599 = vmatprep.subr.mxu0 0.0
        %600 = vmatpush1.xpose.msra.mxu0 0.0
        %601 = vmatprep.subr.mxu0 0.0
        %602 = vmatpush1.xpose.msra.mxu0 0.0
        %603 = vmatprep.mubr.f32.mxu0 0.0
        %604 = vmatmul.mubr.f32.gmra.mrb[0].mxu0 %v525
        %v605 = vpop.f32.mrb[0].mxu0
        %v606 = vadd.f32 0.0, %v605
        %v607 = vpop.f32.mrb[0].mxu0
        %608 = vdwg.mxu0
        %vm609 = vcmask 261120
        %610 = vst.msk [vmem:[%s348] sm:$0xff] %vm609, %v606
        %v611 = vld [vmem:[%s3] sm:$0xff]
        %vm612 = vcmask 64512
        %v614 = vsel %vm612, %v611, 0
        %616 = vmatprep.subr.mxu0 0.0
        %617 = vmatpush1.msra.mxu0 %v606
        %618 = vmatprep.subr.mxu0 0.0
        %619 = vmatpush1.msra.mxu0 0.0
        %620 = vmatprep.subr.mxu0 0.0
        %621 = vmatpush1.msra.mxu0 0.0
        %622 = vmatprep.subr.mxu0 0.0
        %623 = vmatpush1.msra.mxu0 0.0
        %624 = vmatprep.subr.mxu0 0.0
        %625 = vmatpush1.msra.mxu0 0.0
        %626 = vmatprep.subr.mxu0 0.0
        %627 = vmatpush1.msra.mxu0 0.0
        %628 = vmatprep.subr.mxu0 0.0
        %629 = vmatpush1.msra.mxu0 0.0
        %630 = vmatprep.subr.mxu0 0.0
        %631 = vmatpush1.msra.mxu0 0.0
        %632 = vmatprep.subr.mxu0 0.0
        %633 = vmatpush1.msra.mxu0 0.0
        %634 = vmatprep.subr.mxu0 0.0
        %635 = vmatpush1.msra.mxu0 0.0
        %636 = vmatprep.subr.mxu0 0.0
        %637 = vmatpush1.msra.mxu0 0.0
        %638 = vmatprep.subr.mxu0 0.0
        %639 = vmatpush1.msra.mxu0 0.0
        %640 = vmatprep.subr.mxu0 0.0
        %641 = vmatpush1.msra.mxu0 0.0
        %642 = vmatprep.subr.mxu0 0.0
        %643 = vmatpush1.msra.mxu0 0.0
        %644 = vmatprep.subr.mxu0 0.0
        %645 = vmatpush1.msra.mxu0 0.0
        %646 = vmatprep.subr.mxu0 0.0
        %647 = vmatpush1.msra.mxu0 0.0
        %648 = vmatprep.subr.mxu0 0.0
        %649 = vmatpush1.msra.mxu0 0.0
        %650 = vmatprep.subr.mxu0 0.0
        %651 = vmatpush1.msra.mxu0 0.0
        %652 = vmatprep.subr.mxu0 0.0
        %653 = vmatpush1.msra.mxu0 0.0
        %654 = vmatprep.subr.mxu0 0.0
        %655 = vmatpush1.msra.mxu0 0.0
        %656 = vmatprep.subr.mxu0 0.0
        %657 = vmatpush1.msra.mxu0 0.0
        %658 = vmatprep.subr.mxu0 0.0
        %659 = vmatpush1.msra.mxu0 0.0
        %660 = vmatprep.subr.mxu0 0.0
        %661 = vmatpush1.msra.mxu0 0.0
        %662 = vmatprep.subr.mxu0 0.0
        %663 = vmatpush1.msra.mxu0 0.0
        %664 = vmatprep.subr.mxu0 0.0
        %665 = vmatpush1.msra.mxu0 0.0
        %666 = vmatprep.subr.mxu0 0.0
        %667 = vmatpush1.msra.mxu0 0.0
        %668 = vmatprep.subr.mxu0 0.0
        %669 = vmatpush1.msra.mxu0 0.0
        %670 = vmatprep.subr.mxu0 0.0
        %671 = vmatpush1.msra.mxu0 0.0
        %672 = vmatprep.subr.mxu0 0.0
        %673 = vmatpush1.msra.mxu0 0.0
        %674 = vmatprep.subr.mxu0 0.0
        %675 = vmatpush1.msra.mxu0 0.0
        %676 = vmatprep.subr.mxu0 0.0
        %677 = vmatpush1.msra.mxu0 0.0
        %678 = vmatprep.subr.mxu0 0.0
        %679 = vmatpush1.msra.mxu0 0.0
        %680 = vmatprep.mubr.f32.mxu0 0.0
        %681 = vmatmul.mubr.f32.gmra.mrb[0].mxu0 %v614
        %v682 = vpop.f32.mrb[0].mxu0
        %v683 = vadd.f32 0.0, %v682
        %v684 = vpop.f32.mrb[0].mxu0
        %685 = vdwg.mxu0
        %vm686 = vcmp.ge.f32.partialorder %v683, 0.0
        %v687 = vmul.f32 %v683, 0.2
        %v688 = vsel %vm686, %v683, %v687
        %v689 = vld [vmem:[%s4] sm:$0xff]
        %v690 = vld [vmem:[%s4 + $0x8] sm:$0xff]
        %v691 = vld [vmem:[%s4 + $0x10] sm:$0xff]
        %v692 = vld [vmem:[%s4 + $0x18] sm:$0xff]
        %v694 = vsel %vm609, %v688, 0
        %696 = vmatprep.subr.mxu0 0.0
        %697 = vmatpush1.msra.mxu0 %v689
        %698 = vmatprep.subr.mxu0 0.0
        %699 = vmatpush1.msra.mxu0 %v690
        %700 = vmatprep.subr.mxu0 0.0
        %701 = vmatpush1.msra.mxu0 %v691
        %702 = vmatprep.subr.mxu0 0.0
        %703 = vmatpush1.msra.mxu0 %v692
        %704 = vmatprep.subr.mxu0 0.0
        %705 = vmatpush1.msra.mxu0 0.0
        %706 = vmatprep.subr.mxu0 0.0
        %707 = vmatpush1.msra.mxu0 0.0
        %708 = vmatprep.subr.mxu0 0.0
        %709 = vmatpush1.msra.mxu0 0.0
        %710 = vmatprep.subr.mxu0 0.0
        %711 = vmatpush1.msra.mxu0 0.0
        %712 = vmatprep.subr.mxu0 0.0
        %713 = vmatpush1.msra.mxu0 0.0
        %714 = vmatprep.subr.mxu0 0.0
        %715 = vmatpush1.msra.mxu0 0.0
        %716 = vmatprep.subr.mxu0 0.0
        %717 = vmatpush1.msra.mxu0 0.0
        %718 = vmatprep.subr.mxu0 0.0
        %719 = vmatpush1.msra.mxu0 0.0
        %720 = vmatprep.subr.mxu0 0.0
        %721 = vmatpush1.msra.mxu0 0.0
        %722 = vmatprep.subr.mxu0 0.0
        %723 = vmatpush1.msra.mxu0 0.0
        %724 = vmatprep.subr.mxu0 0.0
        %725 = vmatpush1.msra.mxu0 0.0
        %726 = vmatprep.subr.mxu0 0.0
        %727 = vmatpush1.msra.mxu0 0.0
        %728 = vmatprep.subr.mxu0 0.0
        %729 = vmatpush1.msra.mxu0 0.0
        %730 = vmatprep.subr.mxu0 0.0
        %731 = vmatpush1.msra.mxu0 0.0
        %732 = vmatprep.subr.mxu0 0.0
        %733 = vmatpush1.msra.mxu0 0.0
        %734 = vmatprep.subr.mxu0 0.0
        %735 = vmatpush1.msra.mxu0 0.0
        %736 = vmatprep.subr.mxu0 0.0
        %737 = vmatpush1.msra.mxu0 0.0
        %738 = vmatprep.subr.mxu0 0.0
        %739 = vmatpush1.msra.mxu0 0.0
        %740 = vmatprep.subr.mxu0 0.0
        %741 = vmatpush1.msra.mxu0 0.0
        %742 = vmatprep.subr.mxu0 0.0
        %743 = vmatpush1.msra.mxu0 0.0
        %744 = vmatprep.subr.mxu0 0.0
        %745 = vmatpush1.msra.mxu0 0.0
        %746 = vmatprep.subr.mxu0 0.0
        %747 = vmatpush1.msra.mxu0 0.0
        %748 = vmatprep.subr.mxu0 0.0
        %749 = vmatpush1.msra.mxu0 0.0
        %750 = vmatprep.subr.mxu0 0.0
        %751 = vmatpush1.msra.mxu0 0.0
        %752 = vmatprep.subr.mxu0 0.0
        %753 = vmatpush1.msra.mxu0 0.0
        %754 = vmatprep.subr.mxu0 0.0
        %755 = vmatpush1.msra.mxu0 0.0
        %756 = vmatprep.subr.mxu0 0.0
        %757 = vmatpush1.msra.mxu0 0.0
        %758 = vmatprep.subr.mxu0 0.0
        %759 = vmatpush1.msra.mxu0 0.0
        %760 = vmatprep.mubr.f32.mxu0 0.0
        %761 = vmatmul.mubr.f32.gmra.mrb[0].mxu0 %v694
        %v762 = vpop.f32.mrb[0].mxu0
        %v763 = vadd.f32 0.0, %v762
        %v764 = vpop.f32.mrb[0].mxu0
        %765 = vdwg.mxu0
        %v766 = vadd.f32 %v606, %v763
        %767 = vst.msk [vmem:[%s355] sm:$0xff] %vm609, %v766
        %v768 = vsel %vm609, %v766, 0.0
        %v769 = vrot.slane %v768, 4
        %v770 = vadd.f32 %v768, %v769
        %v771 = vrot.slane %v770, 2
        %v772 = vadd.f32 %v770, %v771
        %v773 = vrot.slane %v772, 1
        %v774 = vadd.f32 %v772, %v773
        %v775 = vrcp.pop 8.0
        %v776 = vmul.f32 %v774, %v775
        %vm777 = vcmask 253952
        %778 = vst.msk [vmem:[%s361] sm:$0x1] %vm777, %v776
        %p779 = scmp.lt.s32.totalorder %s30, 1
        %s780 = scalar_select %p779, %s30, 1
        %s781 = smul.addr %s780, 8
        %s782 = scalar_lea.vmem %s5, %s781
        %s783 = sand.u32 %s174, 1
        %s784 = scalar_lea.sflag [#allocation4], %s783
        %s785 = sand.u32 %s174, 1
        %s786 = smul.addr %s785, 8
        %s787 = scalar_lea.vmem [#allocation7], %s786
        %s788 = sand.u32 %s30, 1
        %s789 = scalar_lea.sflag [#allocation9], %s788
        %s790 = sand.u32 %s200, 1
        %s791 = smul.addr %s790, 8
        %s792 = scalar_lea.vmem [#allocation8], %s791
        %s793 = sand.u32 %s30, 1
        %s794 = scalar_lea.sflag [#allocation9], %s793
        %s795 = sand.u32 %s226, 1
        %s796 = scalar_lea.vmem [#allocation10], %s795
        // Predicated region
        $region49: #{tpu_custom_call.1} parent=39 // pred_check
          %p797 = pneg %p158
        $region50: #{tpu_custom_call.1} parent=39 // pred_check_branch
          %799 = sbr.rel (%p797) target = $region52
        $region51: #{tpu_custom_call.1} parent=39 // pred_region
          _
        $region52: #{tpu_custom_call.1} parent=39 // pred_fallthru
          _
        // Predicated region
        $region53: #{tpu_custom_call.1} parent=39 // pred_check
          %p800 = pneg %p184
        $region54: #{tpu_custom_call.1} parent=39 // pred_check_branch
          %802 = sbr.rel (%p800) target = $region56
        $region55: #{tpu_custom_call.1} parent=39 // pred_region
          %s804 = ssub.s32 128, 128
          %805 = vsyncadd %s784, %s804
          %s806 = smul.addr %s30, 128
          %s807 = scalar_lea.hbm %s6, %s806
          %s809 = sshll.u32 %s787, 4
          %s810 = int_to_ptr.vmem [resolvable:$true] %s809
          %812 = dma.vmem_to_hbm [thread:$0]  %s810, 128, %s807, %s784
        $region56: #{tpu_custom_call.1} parent=39 // pred_fallthru
          _
        // Predicated region
        $region57: #{tpu_custom_call.1} parent=39 // pred_check
          %p813 = pneg %p210
        $region58: #{tpu_custom_call.1} parent=39 // pred_check_branch
          %815 = sbr.rel (%p813) target = $region60
        $region59: #{tpu_custom_call.1} parent=39 // pred_region
          %s817 = ssub.s32 128, 128
          %818 = vsyncadd %s789, %s817
          %s819 = smul.addr %s30, 128
          %s820 = scalar_lea.hbm %s7, %s819
          %s822 = sshll.u32 %s792, 4
          %s823 = int_to_ptr.vmem [resolvable:$true] %s822
          %825 = dma.vmem_to_hbm [thread:$0]  %s823, 128, %s820, %s789
        $region60: #{tpu_custom_call.1} parent=39 // pred_fallthru
          _
        // Predicated region
        $region61: #{tpu_custom_call.1} parent=39 // pred_check
          %p826 = pneg %p236
        $region62: #{tpu_custom_call.1} parent=39 // pred_check_branch
          %828 = sbr.rel (%p826) target = $region64
        $region63: #{tpu_custom_call.1} parent=39 // pred_region
          %s830 = ssub.s32 16, 16
          %831 = vsyncadd %s794, %s830
          %s832 = smul.addr %s30, 16
          %s833 = scalar_lea.hbm %s8, %s832
          %s835 = sshll.u32 %s796, 4
          %s836 = int_to_ptr.vmem [resolvable:$true] %s835
          %838 = dma.vmem_to_hbm [thread:$0]  %s836, 16, %s833, %s794
        $region64: #{tpu_custom_call.1} parent=39 // pred_fallthru
          _
      $region40: #{tpu_custom_call.1} parent=5 // pred_fallthru
        _
      %p839 = scmp.le.s32.totalorder 2, %s25
      // Predicated region
      $region65: #{tpu_custom_call.1} parent=5 // pred_check
        %p840 = pneg %p839
      $region66: #{tpu_custom_call.1} parent=5 // pred_check_branch
        %842 = sbr.rel (%p840) target = $region68
      $region67: #{tpu_custom_call.1} parent=5 // pred_region
        %s843 = ssub.s32 %s25, 2
        // Predicated region
        $region69: #{tpu_custom_call.1} parent=67 // pred_check
          %p844 = pneg %p164
        $region70: #{tpu_custom_call.1} parent=67 // pred_check_branch
          %846 = sbr.rel (%p844) target = $region72
        $region71: #{tpu_custom_call.1} parent=67 // pred_region
          %p847 = scmp.lt.s32.totalorder %s31, 1
          %s848 = scalar_select %p847, %s31, 1
          %s849 = smul.addr %s848, 8
          %s850 = scalar_lea.vmem %s5, %s849
        $region72: #{tpu_custom_call.1} parent=67 // pred_fallthru
          _
        // Predicated region
        $region73: #{tpu_custom_call.1} parent=67 // pred_check
          %p851 = pneg %p190
        $region74: #{tpu_custom_call.1} parent=67 // pred_check_branch
          %853 = sbr.rel (%p851) target = $region76
        $region75: #{tpu_custom_call.1} parent=67 // pred_region
          %s854 = sand.u32 %s175, 1
          %s855 = scalar_lea.sflag [#allocation4], %s854
          %s856 = sand.u32 %s175, 1
          %s857 = smul.addr %s856, 8
          %s858 = scalar_lea.vmem [#allocation7], %s857
          %859 = dma.done %s855, 128
        $region76: #{tpu_custom_call.1} parent=67 // pred_fallthru
          _
        // Predicated region
        $region77: #{tpu_custom_call.1} parent=67 // pred_check
          %p860 = pneg %p216
        $region78: #{tpu_custom_call.1} parent=67 // pred_check_branch
          %862 = sbr.rel (%p860) target = $region80
        $region79: #{tpu_custom_call.1} parent=67 // pred_region
          %s863 = sand.u32 %s31, 1
          %s864 = scalar_lea.sflag [#allocation9], %s863
          %s865 = sand.u32 %s201, 1
          %s866 = smul.addr %s865, 8
          %s867 = scalar_lea.vmem [#allocation8], %s866
          %868 = dma.done %s864, 128
        $region80: #{tpu_custom_call.1} parent=67 // pred_fallthru
          _
        // Predicated region
        $region81: #{tpu_custom_call.1} parent=67 // pred_check
          %p869 = pneg %p242
        $region82: #{tpu_custom_call.1} parent=67 // pred_check_branch
          %871 = sbr.rel (%p869) target = $region84
        $region83: #{tpu_custom_call.1} parent=67 // pred_region
          %s872 = sand.u32 %s31, 1
          %s873 = scalar_lea.sflag [#allocation9], %s872
          %s874 = sand.u32 %s227, 1
          %s875 = scalar_lea.vmem [#allocation10], %s874
          %876 = dma.done %s873, 16
        $region84: #{tpu_custom_call.1} parent=67 // pred_fallthru
          _
      $region68: #{tpu_custom_call.1} parent=5 // pred_fallthru
        _
    $region6: #{tpu_custom_call.1} parent=1 // loop_footer
      %s29 = sadd.s32 1, %s25
    $region7: #{tpu_custom_call.1} parent=1 // loop_footer_branch
      %24 = sbr.rel target = $region3
    $region8: #{tpu_custom_call.1} parent=1 // loop_exit
      _
    %877 = vsyncpa [#allocation3], 1
    %s878 = scalar_lea.sflag [#allocation3], 1
    %879 = vsyncpa %s878, 1
    %880 = vsyncpa [#allocation6], 1
    %881 = vsyncpa [#allocation4], 1
    %s882 = scalar_lea.sflag [#allocation4], 1
    %883 = vsyncpa %s882, 1
    %884 = vsyncpa [#allocation9], 1
    %s885 = scalar_lea.sflag [#allocation9], 1
    %886 = vsyncpa %s885, 1

</llo_original>
